<compile_context>
chip_gen: v5e
topology: v5e:2x2
jax: 0.10.0
libtpu: 0.0.40
codegen_flags: <defaults>
</compile_context>

<pallas_src>
import math

import jax
import jax.numpy as jnp
from jax.experimental import pallas as pl
from jax.experimental.pallas import tpu as pltpu

_LANE = 128
_MIB = 1024 * 1024


def _make_act_kernel(non_lin: str):
    """Build the elementwise activation kernel body (non_lin is static)."""
    if non_lin == "relu":
        def kernel(x_ref, o_ref):
            x = x_ref[...]
            o_ref[...] = jnp.maximum(x, jnp.zeros_like(x))
    elif non_lin == "leakyrelu":
        def kernel(x_ref, o_ref):
            x = x_ref[...]
            # max(x, 0.2*x) == LeakyReLU(x, 0.2) for slope in (0, 1);
            # mul+max is cheaper on the VPU than compare+select.
            o_ref[...] = jnp.maximum(x, x * jnp.asarray(0.2, x.dtype))
    else:
        raise ValueError(f"unsupported non_lin: {non_lin!r}")
    return kernel


def _sublane_for(dtype) -> int:
    """Sublane granularity for dense vreg packing: 8 (f32), 16 (bf16), 32 (int8/fp8)."""
    itemsize = jnp.dtype(dtype).itemsize
    return max(8, 32 // max(1, itemsize))


def _device_budget():
    """(vmem_capacity_bytes, num_tensorcores) with conservative fallbacks."""
    vmem_bytes = 64 * _MIB  # conservative default = v7x physical VMEM per TC
    try:
        info = pltpu.get_tpu_info()
        cap = int(getattr(info, "vmem_capacity_bytes", 0) or 0)
        if cap > 0:
            vmem_bytes = cap
    except Exception:
        pass
    num_tc = 1
    try:
        kind = jax.devices()[0].device_kind.lower().replace(" ", "")
        # v4 / v5p megacore and v7x expose 2 TensorCores worth of parallelism.
        if any(tag in kind for tag in ("v4", "v5p", "v7", "tpu7")):
            num_tc = 2
    except Exception:
        pass
    return vmem_bytes, num_tc


def act_fun(x: jax.Array, non_lin: str = "relu", donate: bool = False) -> jax.Array:
    """ActFun.forward(x): elementwise activation, any shape, via Pallas."""
    orig_shape = x.shape
    dtype = x.dtype
    itemsize = jnp.dtype(dtype).itemsize
    n = math.prod(orig_shape) if orig_shape else 1

    if non_lin == "leakyrelu" and not jnp.issubdtype(dtype, jnp.floating):
        raise TypeError("leakyrelu(0.2) requires a floating-point input dtype")

    if n == 0:
        return jnp.reshape(x, orig_shape)

    kernel = _make_act_kernel(non_lin)
    vmem_bytes, num_tc = _device_budget()

    # ~8 MiB blocks, never more than vmem/8 so (2 arrays x 2 pipeline buffers)
    # stays <= vmem/2; set the scoped-VMEM limit explicitly with headroom.
    block_bytes = max(_MIB, min(8 * _MIB, vmem_bytes // 8))
    vmem_limit = int(min(vmem_bytes, 4 * block_bytes + 8 * _MIB))

    compiler_params = pltpu.CompilerParams(
        dimension_semantics=("parallel",),
        vmem_limit_bytes=vmem_limit,
    )
    io_alias = {0: 0} if donate else {}
    flops_per_elem = 2 if non_lin == "leakyrelu" else 1

    def run_tiled(slab, rows):
        """Lane-dense (rows, 128) streaming path (big contiguous DMAs)."""
        sublane = _sublane_for(dtype)
        max_rows = max(
            sublane, (block_bytes // (_LANE * itemsize)) // sublane * sublane
        )
        steps = pl.cdiv(rows, max_rows)
        total_bytes = rows * _LANE * itemsize
        if num_tc > 1 and total_bytes >= 2 * _MIB:
            # Multi-TC: even number of near-equal blocks for balanced sharding.
            steps = max(steps, num_tc)
            steps = -(-steps // num_tc) * num_tc
            tile_rows = pl.cdiv(pl.cdiv(rows, steps), sublane) * sublane
            tile_rows = max(sublane, min(tile_rows, max_rows))
        else:
            # Single TC (or tiny tensor): largest block that fits the budget.
            tile_rows = min(max_rows, pl.cdiv(rows, sublane) * sublane)
        grid = (pl.cdiv(rows, tile_rows),)  # partial last block masked by Pallas
        return pl.pallas_call(
            kernel,
            out_shape=jax.ShapeDtypeStruct((rows, _LANE), dtype),
            grid_spec=pltpu.PrefetchScalarGridSpec(
                num_scalar_prefetch=0,
                grid=grid,
                in_specs=[pl.BlockSpec((tile_rows, _LANE), lambda i: (i, 0))],
                out_specs=pl.BlockSpec((tile_rows, _LANE), lambda i: (i, 0)),
            ),
            compiler_params=compiler_params,
            input_output_aliases=io_alias,
            cost_estimate=pl.CostEstimate(
                flops=flops_per_elem * rows * _LANE,
                transcendentals=0,
                bytes_accessed=2 * rows * _LANE * itemsize,
            ),
        )(slab)

    pad = (-n) % _LANE
    if pad == 0:
        # Aligned (the common conv-feature-map case): pure reshape, no extra
        # HBM passes.
        rows = n // _LANE
        out_slab = run_tiled(x.reshape(rows, _LANE), rows)
        return out_slab.reshape(orig_shape)

    # Unaligned. Padded-footprint of one (1, n) buffer in VMEM (sublane dim of 1
    # is padded to 8, lanes to a multiple of 128).
    padded_buf_bytes = 8 * pl.cdiv(n, _LANE) * _LANE * itemsize
    if 4 * padded_buf_bytes <= vmem_limit:
        # Single full-extent block: no pad copy, no trailing slice copy.
        out = pl.pallas_call(
            kernel,
            out_shape=jax.ShapeDtypeStruct((1, n), dtype),
            grid_spec=pltpu.PrefetchScalarGridSpec(
                num_scalar_prefetch=0,
                grid=(1,),
                in_specs=[pl.BlockSpec((1, n), lambda i: (0, 0))],
                out_specs=pl.BlockSpec((1, n), lambda i: (0, 0)),
            ),
            compiler_params=compiler_params,
            input_output_aliases=io_alias,
            cost_estimate=pl.CostEstimate(
                flops=flops_per_elem * n,
                transcendentals=0,
                bytes_accessed=2 * n * itemsize,
            ),
        )(x.reshape(1, n))
        return out.reshape(orig_shape)

    # Fallback for huge unaligned tensors: pad + slice (extra HBM passes, rare).
    flat = jnp.pad(x.reshape(-1), (0, pad))
    rows = (n + pad) // _LANE
    out_slab = run_tiled(flat.reshape(rows, _LANE), rows)
    return out_slab.reshape(-1)[:n].reshape(orig_shape)


if __name__ == "__main__":
    key = jax.random.PRNGKey(0)

    # NCHW input consistent with a conv-style module: batch=2, channels=4, 16x16 spatial.
    x = jax.random.normal(key, (2, 4, 16, 16), dtype=jnp.float32)

    # ReLU branch
    y_relu = act_fun(x, "relu")
    jax.block_until_ready(y_relu)
    ref_relu = jnp.maximum(x, 0.0)
    assert jnp.allclose(y_relu, ref_relu), "relu mismatch"

    # LeakyReLU(0.2) branch
    y_lrelu = act_fun(x, "leakyrelu")
    jax.block_until_ready(y_lrelu)
    ref_lrelu = jnp.where(x >= 0, x, 0.2 * x)
    assert jnp.allclose(y_lrelu, ref_lrelu), "leakyrelu mismatch"

    # Non-128-aligned shape exercises the single-full-block unaligned path
    # (no pad / slice HBM passes).
    x_odd = jax.random.normal(jax.random.PRNGKey(1), (3, 5, 7), dtype=jnp.float32)
    y_odd = act_fun(x_odd, "leakyrelu")
    jax.block_until_ready(y_odd)
    ref_odd = jnp.where(x_odd >= 0, x_odd, 0.2 * x_odd)
    assert jnp.allclose(y_odd, ref_odd), "leakyrelu (unaligned) mismatch"

    # Medium aligned tensor exercises the multi-row tiled (and, on multi-TC
    # chips, balanced-split) path.
    x_med = jax.random.normal(jax.random.PRNGKey(2), (4, 8, 32, 64), dtype=jnp.float32)
    y_med = act_fun(x_med, "relu")
    jax.block_until_ready(y_med)
    assert jnp.allclose(y_med, jnp.maximum(x_med, 0.0)), "relu (medium) mismatch"

    print("KERNEL_OK")
</pallas_src>

<mosaic_0001>
module attributes {stable_mosaic.version = 11 : i64} {
  func.func @kernel(%arg0: i32, %arg1: memref<16x128xf32, #tpu.memory_space<vmem>>, %arg2: memref<16x128xf32, #tpu.memory_space<vmem>>) attributes {dimension_semantics = [#tpu.dimension_semantics<parallel>], iteration_bounds = array<i64: 1>, scalar_prefetch = 0 : i64, scratch_operands = 0 : i64, tpu.core_type = #tpu.core_type<tc>, window_params = [{transform_indices = @transform_0, window_bounds = array<i64: 16, 128>}, {transform_indices = @transform_1, window_bounds = array<i64: 16, 128>}]} {
    %c0 = arith.constant 0 : index
    %c0_0 = arith.constant 0 : index
    %0 = vector.load %arg1[%c0, %c0_0] : memref<16x128xf32, #tpu.memory_space<vmem>>, vector<16x128xf32>
    %cst = arith.constant 0.000000e+00 : f32
    %1 = vector.broadcast %cst : f32 to vector<16x128xf32>
    %2 = arith.maximumf %0, %1 : vector<16x128xf32>
    %c0_1 = arith.constant 0 : index
    %c0_2 = arith.constant 0 : index
    %3 = vector.load %arg2[%c0_1, %c0_2] : memref<16x128xf32, #tpu.memory_space<vmem>>, vector<16x128xf32>
    tpu.vector_store %arg2[%c0_1, %c0_2], %2 {strides = array<i32>} : memref<16x128xf32, #tpu.memory_space<vmem>>, vector<16x128xf32>,
    return
  }
  func.func @transform_0(%arg0: i32) -> (i32, i32) {
    %c0_i32 = arith.constant 0 : i32
    %c0_i32_0 = arith.constant 0 : i32
    return %arg0, %c0_i32 : i32, i32
  }
  func.func @transform_1(%arg0: i32) -> (i32, i32) {
    %c0_i32 = arith.constant 0 : i32
    %c0_i32_0 = arith.constant 0 : i32
    return %arg0, %c0_i32 : i32, i32
  }
}

</mosaic_0001>

<llo_original>
// kernel: tpu_custom_call.1
$region0: #{tpu_custom_call.1}
  #allocation0 [shape = 'u32[]', space=smem, size = 0x4, offset = 0x4, fixed_abs, tag = 'smem constant byte address 0x4 - core index']
  #allocation1 [shape = 'u32[72,128]{1,0:T(1,128)}', space=vmem, size = 0x9000, scoped, tag = 'internal scratch']
  %s0 = inlined_call_operand.hbm [shape: f32[16,128], index: 0, kind: input, shape index: {}]
  %s1 = inlined_call_operand.hbm [shape: f32[16,128], index: 1, kind: output, shape index: {}]
  %s2 = sld [smem:[#allocation0]]
  $region18: #{tpu_custom_call.1} parent=0
    _
  %s4 = ssub.s32 1, %s2
  %s5 = scalar_select 0, %s4, %s2
  $region1: #{tpu_custom_call.1} parent=0
    #allocation2 [shape = 'u8[8192]{0}', space=vmem, size = 0x2000, scoped, tag = 'input window, operand 0, single buffered']
    #allocation3 [shape = 's32[1]{0}', space=sflag, size = 0x4, scoped, tag = 'scoped memory for tpu_custom_call.1']
    #allocation4 [shape = 's32[1]{0}', space=sflag, size = 0x4, scoped, tag = 'scoped memory for tpu_custom_call.1']
    #allocation5 [shape = 'u8[8192]{0}', space=vmem, size = 0x2000, scoped, tag = 'output window, operand 0, single buffered']
    %6 = vsyncpa [#allocation3], 0
    %7 = vsyncpa [#allocation4], 0
    // Predicated region
    $region2: #{tpu_custom_call.1} parent=1 // pred_check
      _
    $region3: #{tpu_custom_call.1} parent=1 // pred_check_branch
      %9 = sbr.rel (0) target = $region5
    $region4: #{tpu_custom_call.1} parent=1 // pred_region
      %11 = vsyncadd [#allocation3], 0
      %s12 = sshll.u32 %s0, 4
      %s13 = int_to_ptr.hbm [resolvable:$true] %s12
      %s14 = sshll.u32 [#allocation2], 4
      %s15 = int_to_ptr.vmem [resolvable:$true] %s14
      %20 = dma.hbm_to_vmem [thread:$0]  %s13, 256, %s15, [#allocation3], 128, 128, 8
    $region5: #{tpu_custom_call.1} parent=1 // pred_fallthru
      _
    // Predicated region
    $region6: #{tpu_custom_call.1} parent=1 // pred_check
      _
    $region7: #{tpu_custom_call.1} parent=1 // pred_check_branch
      %22 = sbr.rel (0) target = $region9
    $region8: #{tpu_custom_call.1} parent=1 // pred_region
      %24 = dma.done [#allocation3], 256
    $region9: #{tpu_custom_call.1} parent=1 // pred_fallthru
      _
    %v25 = vld [vmem:[#allocation2] sm:$0xff]
    %v26 = vld [vmem:[#allocation2 + $0x8] sm:$0xff]
    %v27 = vmax.f32 %v25, 0.0
    %v28 = vmax.f32 %v26, 0.0
    %29 = vst [vmem:[#allocation5] sm:$0xff] %v27
    %30 = vst [vmem:[#allocation5 + $0x8] sm:$0xff] %v28
    // Predicated region
    $region10: #{tpu_custom_call.1} parent=1 // pred_check
      _
    $region11: #{tpu_custom_call.1} parent=1 // pred_check_branch
      %32 = sbr.rel (0) target = $region13
    $region12: #{tpu_custom_call.1} parent=1 // pred_region
      %34 = vsyncadd [#allocation4], 0
      %s35 = sshll.u32 [#allocation5], 4
      %s36 = int_to_ptr.vmem [resolvable:$true] %s35
      %s37 = sshll.u32 %s1, 4
      %s38 = int_to_ptr.hbm [resolvable:$true] %s37
      %43 = dma.vmem_to_hbm [thread:$0]  %s36, 256, %s38, [#allocation4], 128, 128, 8
    $region13: #{tpu_custom_call.1} parent=1 // pred_fallthru
      _
    // Predicated region
    $region14: #{tpu_custom_call.1} parent=1 // pred_check
      _
    $region15: #{tpu_custom_call.1} parent=1 // pred_check_branch
      %45 = sbr.rel (0) target = $region17
    $region16: #{tpu_custom_call.1} parent=1 // pred_region
      %47 = dma.done [#allocation4], 256
    $region17: #{tpu_custom_call.1} parent=1 // pred_fallthru
      _
    %48 = vsyncpa [#allocation3], 1
    %49 = vsyncpa [#allocation4], 1

</llo_original>
